<compile_context>
chip_gen: v5e
topology: v5e:2x2
jax: 0.10.0
libtpu: 0.0.40
codegen_flags: <defaults>
</compile_context>

<pallas_src>
import math

import jax
import jax.numpy as jnp
from jax.experimental import pallas as pl
from jax.experimental.pallas import tpu as pltpu


def _round_up(x: int, m: int) -> int:
    return (x + m - 1) // m * m


# ----------------------------- Pallas kernel ------------------------------ #
def _conv1d_matmul_kernel(w_ref, x_ref, o_ref):
    # w_ref: (N, K)      bf16 filterbank weights (resident across grid steps)
    # x_ref: (1, K, TL)  bf16 im2col frame tile for (batch b, L-tile t)
    # o_ref: (1, N, TL)  f32 encoder output tile
    o_ref[0] = jnp.dot(
        w_ref[...], x_ref[0], preferred_element_type=jnp.float32
    )


def _encoder_conv1d(frames, weight2d, *, tile_l=512):
    """frames: (B, K, L) bf16, weight2d: (N, K) bf16 -> (B, N, L) float32."""
    B, K, L = frames.shape
    N = weight2d.shape[0]

    # Lane-dense tile along L: a multiple of 128, at most `tile_l`, and no
    # larger than needed for short inputs.  Pad L up to a multiple of it so
    # every grid step is a full, unmasked tile.
    tl = max(128, min(_round_up(tile_l, 128), _round_up(L, 128)))
    lp = _round_up(L, tl)
    if lp != L:
        frames = jnp.pad(frames, ((0, 0), (0, 0), (0, lp - L)))

    out = pl.pallas_call(
        _conv1d_matmul_kernel,
        out_shape=jax.ShapeDtypeStruct((B, N, lp), jnp.float32),
        grid_spec=pltpu.PrefetchScalarGridSpec(
            num_scalar_prefetch=0,
            grid=(B, lp // tl),
            in_specs=[
                pl.BlockSpec((N, K), lambda b, t: (0, 0)),
                pl.BlockSpec((1, K, tl), lambda b, t: (b, 0, t)),
            ],
            out_specs=pl.BlockSpec((1, N, tl), lambda b, t: (b, 0, t)),
        ),
        compiler_params=pltpu.CompilerParams(
            dimension_semantics=("parallel", "parallel"),
            vmem_limit_bytes=32 * 1024 * 1024,
        ),
    )(weight2d, frames)
    return out[:, :, :L]


# ------------------------------ Python glue ------------------------------- #
def pad_to_lcm(x, lcm):
    """Zero-pad the last axis of x so that its length is a multiple of lcm."""
    rem = int(x.shape[-1]) % lcm
    if rem:
        pad_shape = x.shape[:-1] + (lcm - rem,)
        return jnp.concatenate([x, jnp.zeros(pad_shape, x.dtype)], axis=-1)
    return x


class PadderPallas:
    """JAX/Pallas equivalent of _Padder wrapping a free-filterbank encoder."""

    def __init__(self, n_filters=64, upsampling_depth=4, kernel_size=21,
                 seed=0, compute_dtype=jnp.bfloat16):
        self.upsampling_depth = upsampling_depth
        self.kernel_size = kernel_size
        self.stride = kernel_size // 2
        self.lcm = abs(self.stride * 2 ** upsampling_depth) // math.gcd(
            self.stride, 2 ** upsampling_depth
        )
        self.compute_dtype = compute_dtype
        # Deterministic synthetic Conv1d weight, shape (N, 1, K) like PyTorch.
        key = jax.random.PRNGKey(seed)
        self.weight = (
            jax.random.normal(key, (n_filters, 1, kernel_size), jnp.float32)
            / math.sqrt(kernel_size)
        )

    def __call__(self, x):
        # x: (B, 1, T) NCW
        x = pad_to_lcm(x, self.lcm)
        B, C, Tp = x.shape
        assert C == 1, "free-filterbank encoder expects a single input channel"
        K = self.kernel_size
        S = self.stride
        L = (Tp - K) // S + 1

        # Stream in bf16 (f32 accumulation happens inside the kernel).
        sig = x[:, 0, :].astype(self.compute_dtype)  # (B, Tp)

        # im2col via K static strided slices (no XLA gather):
        #   frames[b, k, l] = sig[b, l*S + k]
        cols = [
            jax.lax.slice_in_dim(sig, k, k + S * (L - 1) + 1, stride=S, axis=1)
            for k in range(K)
        ]
        frames = jnp.stack(cols, axis=1)  # (B, K, L)

        w2d = self.weight[:, 0, :].astype(self.compute_dtype)  # (N, K)
        return _encoder_conv1d(frames, w2d)  # (B, N, L) float32


# --------------------------------- main ------------------------------------ #
if __name__ == "__main__":
    key = jax.random.PRNGKey(0)
    B, T = 2, 7993  # not a multiple of lcm=80 -> exercises the padding path;
                    # long enough that L=798 -> two 512-wide L tiles per batch.
    x = jax.random.normal(key, (B, 1, T), jnp.float32)

    model = PadderPallas(n_filters=64, upsampling_depth=4, kernel_size=21)
    out = jax.block_until_ready(jax.jit(model.__call__)(x))

    # Reference: identical computation with the same bf16-quantized operands
    # and f32 accumulation (matches the kernel's bf16 x bf16 -> f32 MXU path).
    xp = pad_to_lcm(x, model.lcm)
    xq = xp.astype(jnp.bfloat16).astype(jnp.float32)
    wq = model.weight.astype(jnp.bfloat16).astype(jnp.float32)
    ref = jax.lax.conv_general_dilated(
        xq, wq, window_strides=(model.stride,), padding="VALID",
        dimension_numbers=("NCH", "OIH", "NCH"),
        preferred_element_type=jnp.float32,
    )
    assert out.shape == ref.shape, (out.shape, ref.shape)
    max_err = float(jnp.max(jnp.abs(out - ref)))
    assert jnp.allclose(out, ref, atol=1e-2, rtol=1e-2), max_err

    print("KERNEL_OK")
</pallas_src>

<mosaic_0001>
module attributes {stable_mosaic.version = 11 : i64} {
  func.func @_conv1d_matmul_kernel(%arg0: i32, %arg1: i32, %arg2: memref<64x21xbf16, #tpu.memory_space<vmem>>, %arg3: memref<1x21x512xbf16, #tpu.memory_space<vmem>>, %arg4: memref<1x64x512xf32, #tpu.memory_space<vmem>>) attributes {dimension_semantics = [#tpu.dimension_semantics<parallel>, #tpu.dimension_semantics<parallel>], iteration_bounds = array<i64: 2, 2>, scalar_prefetch = 0 : i64, scratch_operands = 0 : i64, tpu.core_type = #tpu.core_type<tc>, window_params = [{pipeline_mode = #tpu.pipeline_mode<synchronous>, transform_indices = @transform_0, window_bounds = array<i64: 64, 21>}, {transform_indices = @transform_1, window_bounds = array<i64: 1, 21, 512>}, {transform_indices = @transform_2, window_bounds = array<i64: 1, 64, 512>}]} {
    %c0 = arith.constant 0 : index
    %c0_0 = arith.constant 0 : index
    %0 = vector.load %arg2[%c0, %c0_0] : memref<64x21xbf16, #tpu.memory_space<vmem>>, vector<64x21xbf16>
    %c0_1 = arith.constant 0 : index
    %c0_2 = arith.constant 0 : index
    %c0_3 = arith.constant 0 : index
    %1 = vector.load %arg3[%c0_1, %c0_2, %c0_3] : memref<1x21x512xbf16, #tpu.memory_space<vmem>>, vector<1x21x512xbf16>
    %2 = vector.shape_cast %1 : vector<1x21x512xbf16> to vector<21x512xbf16>
    %cst = arith.constant dense<0.000000e+00> : vector<64x512xf32>
    %3 = tpu.matmul %0, %2, %cst {dimension_numbers = #tpu.dot_dimension_numbers<[1], [0], [0], [1], [0, 0, 1, 1], [], []>} : vector<64x21xbf16>, vector<21x512xbf16>, vector<64x512xf32> -> vector<64x512xf32>
    %c0_4 = arith.constant 0 : index
    %c0_5 = arith.constant 0 : index
    %c0_6 = arith.constant 0 : index
    %4 = vector.load %arg4[%c0_4, %c0_5, %c0_6] : memref<1x64x512xf32, #tpu.memory_space<vmem>>, vector<1x64x512xf32>
    %5 = vector.shape_cast %4 : vector<1x64x512xf32> to vector<64x512xf32>
    %6 = vector.shape_cast %3 : vector<64x512xf32> to vector<1x64x512xf32>
    tpu.vector_store %arg4[%c0_4, %c0_5, %c0_6], %6 {strides = array<i32>} : memref<1x64x512xf32, #tpu.memory_space<vmem>>, vector<1x64x512xf32>,
    return
  }
  func.func @transform_0(%arg0: i32, %arg1: i32) -> (i32, i32) {
    %c0_i32 = arith.constant 0 : i32
    %c0_i32_0 = arith.constant 0 : i32
    %c0_i32_1 = arith.constant 0 : i32
    return %c0_i32, %c0_i32_0 : i32, i32
  }
  func.func @transform_1(%arg0: i32, %arg1: i32) -> (i32, i32, i32) {
    %c0_i32 = arith.constant 0 : i32
    %c0_i32_0 = arith.constant 0 : i32
    return %arg0, %c0_i32, %arg1 : i32, i32, i32
  }
  func.func @transform_2(%arg0: i32, %arg1: i32) -> (i32, i32, i32) {
    %c0_i32 = arith.constant 0 : i32
    %c0_i32_0 = arith.constant 0 : i32
    return %arg0, %c0_i32, %arg1 : i32, i32, i32
  }
}

</mosaic_0001>

<llo_original>
// kernel: a_call__.1
$region0: #{a_call__.1}
  #allocation0 [shape = 'u32[]', space=smem, size = 0x4, offset = 0x4, fixed_abs, tag = 'smem constant byte address 0x4 - core index']
  #allocation1 [shape = 'u32[72,128]{1,0:T(1,128)}', space=vmem, size = 0x9000, scoped, tag = 'internal scratch']
  %s0 = inlined_call_operand.vmem [shape: bf16[64,21], index: 0, kind: input, shape index: {}]
  %s1 = inlined_call_operand.vmem [shape: bf16[2,21,1024], index: 1, kind: input, shape index: {}]
  %s2 = inlined_call_operand.vmem [shape: f32[2,64,1024], index: 2, kind: output, shape index: {}]
  %s3 = sld [smem:[#allocation0]]
  $region83: #{a_call__.1} parent=0
    _
  %s5 = ssub.s32 1, %s3
  %s6 = scalar_select 0, %s5, %s3
  $region1: #{a_call__.1} parent=0
    #allocation2 [shape = 'u8[49152]{0}', space=vmem, size = 0xc000, scoped, tag = 'input window, operand 1']
    #allocation3 [shape = 'u8[262144]{0}', space=vmem, size = 0x40000, scoped, tag = 'output window, operand 0']
    loop: start=0, step=1, limit=6
    $region2: #{a_call__.1} parent=1 // loop_pre_header
      _
    $region3: #{a_call__.1} parent=1 // loop_header
      %s8 = sphi 0, %s12
      %p9 = scmp.ge.s32.totalorder %s8, 6
      %s15 = sphi 0, %s27
      %s16 = sphi 0, %s23
      %s17 = sphi 0, %s15
      %s18 = sphi 0, %s16
      %s19 = sphi 0, %s17
      %s20 = sphi 0, %s18
      %s28 = sphi 0, %s28
      %s30 = sphi 0, %s28
      %s31 = sphi 0, %s30
      %s45 = sphi 0, %s31
      %s53 = sphi 0, %s55
      %s56 = sphi 0, %s53
      %s57 = sphi 0, %s56
      %s73 = sphi 0, %s57
      %s81 = sphi 0, %s83
      %s84 = sphi 0, %s81
      %s85 = sphi 0, %s84
      %s101 = sphi 0, %s85
    $region4: #{a_call__.1} parent=1 // loop_header_branch
      %11 = sbr.rel (%p9) target = $region8
    $region5: #{a_call__.1} parent=1 // loop_body
      %s13 = ssub.s32 %s8, 1
      %s14 = ssub.s32 %s8, 2
      %s21 = sadd.s32 1, %s16
      %p22 = scmp.ge.s32.totalorder %s21, 2
      %s23 = scalar_select %p22, 0, %s21
      %s24 = sadd.s32 1, %s15
      %s25 = scalar_select %p22, %s24, %s15
      %p26 = scmp.ge.s32.totalorder %s25, 2
      %s27 = scalar_select %p26, 0, %s25
      %s29 = sadd.s32 %s28, 1
      %p32 = scmp.eq.s32.totalorder %s8, 3
      %p33 = scmp.ne.s32.totalorder %s28, %s30
      %p34 = scmp.eq.s32.totalorder %s8, 0
      %p35 = por %p33, %p34
      %p36 = scmp.ne.s32.totalorder %s28, %s30
      %p37 = scmp.eq.s32.totalorder %s13, 3
      %p38 = por %p36, %p37
      %p39 = scmp.ne.s32.totalorder %s30, %s31
      %p40 = scmp.eq.s32.totalorder %s13, 0
      %p41 = por %p39, %p40
      %p42 = scmp.ne.s32.totalorder %s30, %s31
      %p43 = scmp.eq.s32.totalorder %s14, 3
      %p44 = por %p42, %p43
      %p46 = scmp.ne.s32.totalorder %s31, %s45
      %p47 = scmp.eq.s32.totalorder %s14, 0
      %p48 = por %p46, %p47
      %s49 = ssub.s32 %s15, %s27
      %s50 = ssub.s32 %s16, %s23
      %s51 = sor.u32 %s49, %s50
      %p52 = scmp.eq.s32.totalorder %s51, 0
      %s54 = sadd.s32 %s53, 1
      %s55 = scalar_select %p52, %s53, %s54
      %p58 = pneg %p52
      %p59 = scmp.eq.s32.totalorder %s8, 3
      %p60 = por %p58, %p59
      %p61 = scmp.ne.s32.totalorder %s53, %s56
      %p62 = scmp.eq.s32.totalorder %s8, 0
      %p63 = por %p61, %p62
      %p64 = scmp.ne.s32.totalorder %s53, %s56
      %p65 = scmp.eq.s32.totalorder %s13, 3
      %p66 = por %p64, %p65
      %p67 = scmp.ne.s32.totalorder %s56, %s57
      %p68 = scmp.eq.s32.totalorder %s13, 0
      %p69 = por %p67, %p68
      %p70 = scmp.ne.s32.totalorder %s56, %s57
      %p71 = scmp.eq.s32.totalorder %s14, 3
      %p72 = por %p70, %p71
      %p74 = scmp.ne.s32.totalorder %s57, %s73
      %p75 = scmp.eq.s32.totalorder %s14, 0
      %p76 = por %p74, %p75
      %s77 = ssub.s32 %s15, %s27
      %s78 = ssub.s32 %s16, %s23
      %s79 = sor.u32 %s77, %s78
      %p80 = scmp.eq.s32.totalorder %s79, 0
      %s82 = sadd.s32 %s81, 1
      %s83 = scalar_select %p80, %s81, %s82
      %p86 = pneg %p80
      %p87 = scmp.eq.s32.totalorder %s8, 3
      %p88 = por %p86, %p87
      %p89 = scmp.ne.s32.totalorder %s81, %s84
      %p90 = scmp.eq.s32.totalorder %s8, 0
      %p91 = por %p89, %p90
      %p92 = scmp.ne.s32.totalorder %s81, %s84
      %p93 = scmp.eq.s32.totalorder %s13, 3
      %p94 = por %p92, %p93
      %p95 = scmp.ne.s32.totalorder %s84, %s85
      %p96 = scmp.eq.s32.totalorder %s13, 0
      %p97 = por %p95, %p96
      %p98 = scmp.ne.s32.totalorder %s84, %s85
      %p99 = scmp.eq.s32.totalorder %s14, 3
      %p100 = por %p98, %p99
      %p102 = scmp.ne.s32.totalorder %s85, %s101
      %p103 = scmp.eq.s32.totalorder %s14, 0
      %p104 = por %p102, %p103
      %p105 = scmp.le.s32.totalorder 1, %s8
      %p106 = scmp.lt.s32.totalorder %s8, 5
      %p107 = pnand %p105, %p106
      %p108 = pneg %p107
      // Predicated region
      $region9: #{a_call__.1} parent=5 // pred_check
        _
      $region10: #{a_call__.1} parent=5 // pred_check_branch
        %110 = sbr.rel (%p107) target = $region12
      $region11: #{a_call__.1} parent=5 // pred_region
        %s111 = ssub.s32 %s8, 1
        // Predicated region
        $region13: #{a_call__.1} parent=11 // pred_check
          %p112 = pneg %p41
        $region14: #{a_call__.1} parent=11 // pred_check_branch
          %114 = sbr.rel (%p112) target = $region16
        $region15: #{a_call__.1} parent=11 // pred_region
          _
        $region16: #{a_call__.1} parent=11 // pred_fallthru
          _
      $region12: #{a_call__.1} parent=5 // pred_fallthru
        _
      %p115 = scmp.lt.s32.totalorder %s8, 4
      // Predicated region
      $region17: #{a_call__.1} parent=5 // pred_check
        %p116 = pneg %p115
      $region18: #{a_call__.1} parent=5 // pred_check_branch
        %118 = sbr.rel (%p116) target = $region20
      $region19: #{a_call__.1} parent=5 // pred_region
        // Predicated region
        $region21: #{a_call__.1} parent=19 // pred_check
          %p119 = pneg %p63
        $region22: #{a_call__.1} parent=19 // pred_check_branch
          %121 = sbr.rel (%p119) target = $region24
        $region23: #{a_call__.1} parent=19 // pred_region
          %s122 = sand.u32 %s53, 1
          %s123 = sand.u32 %s53, 1
          %s124 = smul.addr %s123, 48
          %s125 = scalar_lea.vmem [#allocation2], %s124
          %s126 = smul.u32 4, %s16
          %s127 = smul.addr %s15, 24
          %s128 = sadd.s32 %s126, %s127
          %s129 = smul.addr %s128, 4
          %s130 = scalar_lea.vmem %s1, %s129
          // Predicated region
          $region25: #{a_call__.1} parent=23 // pred_check
            _
          $region26: #{a_call__.1} parent=23 // pred_check_branch
            %132 = sbr.rel (0) target = $region28
          $region27: #{a_call__.1} parent=23 // pred_region
            // Predicated region
            $region29: #{a_call__.1} parent=27 // pred_check
              _
            $region30: #{a_call__.1} parent=27 // pred_check_branch
              %134 = sbr.rel (0) target = $region32
            $region31: #{a_call__.1} parent=27 // pred_region
              loop: start=0, step=1, limit=1
              $region33: #{a_call__.1} parent=31 // loop_pre_header
                _
              $region34: #{a_call__.1} parent=31 // loop_header
                %s136 = sphi 0, %s140
                %p137 = scmp.ge.s32.totalorder %s136, 1
                %s141 = sphi %s130, %s130
                %s142 = sphi %s125, %s125
              $region35: #{a_call__.1} parent=31 // loop_header_branch
                %139 = sbr.rel (%p137) target = $region39
              $region36: #{a_call__.1} parent=31 // loop_body
                %v143 = vld [vmem:[%s141] sm:$0xff]
                %144 = vst [vmem:[%s142] sm:$0xff] %v143
                %v145 = vld [vmem:[%s141 + $0x8] sm:$0xff]
                %146 = vst [vmem:[%s142 + $0x8] sm:$0xff] %v145
                %v147 = vld [vmem:[%s141 + $0x20] sm:$0xff]
                %148 = vst [vmem:[%s142 + $0x10] sm:$0xff] %v147
                %v149 = vld [vmem:[%s141 + $0x28] sm:$0xff]
                %150 = vst [vmem:[%s142 + $0x18] sm:$0xff] %v149
                %v151 = vld [vmem:[%s141 + $0x40] sm:$0xff]
                %152 = vst [vmem:[%s142 + $0x20] sm:$0xff] %v151
                %v153 = vld [vmem:[%s141 + $0x48] sm:$0xff]
                %154 = vst [vmem:[%s142 + $0x28] sm:$0xff] %v153
              $region37: #{a_call__.1} parent=31 // loop_footer
                %s140 = sadd.s32 1, %s136
              $region38: #{a_call__.1} parent=31 // loop_footer_branch
                %135 = sbr.rel target = $region34
              $region39: #{a_call__.1} parent=31 // loop_exit
                _
            $region32: #{a_call__.1} parent=27 // pred_fallthru
              _
            // Predicated region
            $region40: #{a_call__.1} parent=27 // pred_check
              _
            $region41: #{a_call__.1} parent=27 // pred_check_branch
              %156 = sbr.rel target = $region43
            $region42: #{a_call__.1} parent=27 // pred_region
              _
            $region43: #{a_call__.1} parent=27 // pred_fallthru
              _
          $region28: #{a_call__.1} parent=23 // pred_fallthru
            _
          %157 = vnop
        $region24: #{a_call__.1} parent=19 // pred_fallthru
          _
      $region20: #{a_call__.1} parent=5 // pred_fallthru
        _
      %p158 = scmp.le.s32.totalorder 1, %s8
      %p159 = scmp.lt.s32.totalorder %s8, 5
      %p160 = pnand %p158, %p159
      %p161 = pneg %p160
      // Predicated region
      $region44: #{a_call__.1} parent=5 // pred_check
        _
      $region45: #{a_call__.1} parent=5 // pred_check_branch
        %163 = sbr.rel (%p160) target = $region47
      $region46: #{a_call__.1} parent=5 // pred_region
        %s164 = ssub.s32 %s8, 1
        %s165 = sand.u32 %s56, 1
        %s166 = sand.u32 %s56, 1
        %s167 = smul.addr %s166, 48
        %s168 = scalar_lea.vmem [#allocation2], %s167
        // Predicated region
        $region48: #{a_call__.1} parent=46 // pred_check
          %p169 = pneg %p69
        $region49: #{a_call__.1} parent=46 // pred_check_branch
          %171 = sbr.rel (%p169) target = $region51
        $region50: #{a_call__.1} parent=46 // pred_region
          _
        $region51: #{a_call__.1} parent=46 // pred_fallthru
          _
        %p172 = pneg %p41
        %p173 = pneg %p38
        %s174 = sand.u32 %s56, 1
        %s175 = sand.u32 %s56, 1
        %s176 = smul.addr %s175, 48
        %s177 = scalar_lea.vmem [#allocation2], %s176
        %p178 = pneg %p69
        %p179 = pneg %p66
        %p180 = pneg %p97
        %p181 = pneg %p94
        %s182 = sand.u32 %s84, 1
        %s183 = sand.u32 %s84, 1
        %s184 = smul.addr %s183, 256
        %s185 = scalar_lea.vmem [#allocation3], %s184
        %s186 = smul.u32 4, %s18
        %s187 = smul.u32 4, %s18
        %v189 = vld [vmem:[%s0] sm:$0xf]
        %v190 = vld [vmem:[%s0 + $0x4] sm:$0xf]
        %v191 = vld [vmem:[%s0 + $0x8] sm:$0xf]
        %v192 = vld [vmem:[%s0 + $0xc] sm:$0xf]
        %v193 = vld [vmem:[%s0 + $0x10] sm:$0xf]
        %v194 = vld [vmem:[%s0 + $0x14] sm:$0xf]
        %v195 = vld [vmem:[%s0 + $0x18] sm:$0xf]
        %v196 = vld [vmem:[%s0 + $0x1c] sm:$0xf]
        %v197 = vld [vmem:[%s168] sm:$0xff]
        %v198 = vld [vmem:[%s168 + $0x8] sm:$0xff]
        %v199 = vld [vmem:[%s168 + $0x10] sm:$0xff]
        %v200 = vld [vmem:[%s168 + $0x18] sm:$0xff]
        %v201 = vld [vmem:[%s168 + $0x20] sm:$0x77]
        %v202 = vld [vmem:[%s168 + $0x28] sm:$0x77]
        %v211 = vunpack.c.l.b16 %v189
        %v212 = vunpack.c.l.b16 %v190
        %v213 = vunpack.c.l.b16 %v191
        %v214 = vunpack.c.l.b16 %v192
        %v215 = vunpack.c.l.b16 %v193
        %v216 = vunpack.c.l.b16 %v194
        %v217 = vunpack.c.l.b16 %v195
        %v218 = vunpack.c.l.b16 %v196
        %v219 = vpack.c.b16 %v212, %v211
        %v220 = vpack.c.b16 %v214, %v213
        %v221 = vpack.c.b16 %v216, %v215
        %v222 = vpack.c.b16 %v218, %v217
        %v229 = vunpack.c.l.b16 %v197
        %v230 = vunpack.c.h.b16 %v197
        %v231 = vunpack.c.l.b16 %v198
        %v232 = vunpack.c.h.b16 %v198
        %v233 = vunpack.c.l.b16 %v199
        %v234 = vunpack.c.h.b16 %v199
        %v235 = vunpack.c.l.b16 %v200
        %v236 = vunpack.c.h.b16 %v200
        %v237 = vunpack.c.l.b16 %v201
        %v238 = vunpack.c.h.b16 %v201
        %v239 = vunpack.c.l.b16 %v202
        %v240 = vunpack.c.h.b16 %v202
        %v241 = vpack.c.b16 %v233, %v229
        %v242 = vpack.c.b16 %v234, %v230
        %v243 = vpack.c.b16 %v235, %v231
        %v244 = vpack.c.b16 %v236, %v232
        %v245 = vpack.c.b16 %v237, %v237
        %v246 = vpack.c.b16 %v238, %v238
        %v247 = vpack.c.b16 %v239, %v239
        %v248 = vpack.c.b16 %v240, %v240
        %vm253 = vcmask 171008
        %v255 = vsel %vm253, %v219, 0
        %v258 = vsel %vm253, %v220, 0
        %v261 = vsel %vm253, %v221, 0
        %v264 = vsel %vm253, %v222, 0
        %vm266 = vcmask 1041408
        %vm267 = vcmask 1042432
        %v268 = vsel %vm266, 4294967295, 65535
        %v269 = vsel %vm267, %v268, 0
        %v271 = vand.u32 %v245, %v269
        %v274 = vand.u32 %v246, %v269
        %v277 = vand.u32 %v247, %v269
        %v280 = vand.u32 %v248, %v269
        %282 = vmatpush.bf16.msra.mxu0 0
        %283 = vmatpush.bf16.msra.mxu0 0
        %284 = vmatpush.bf16.msra.mxu0 0
        %285 = vmatpush.bf16.msra.mxu0 0
        %286 = vmatpush.bf16.msra.mxu0 0
        %287 = vmatpush.bf16.msra.mxu0 0
        %288 = vmatpush.bf16.msra.mxu0 %v271
        %289 = vmatpush.bf16.msra.mxu0 %v241
        %290 = vmatmul.bf16.gmra.mxu0 %v255
        %v291 = vpop.f32.mrf.mxu0
        %v292 = vadd.f32 0.0, %v291
        %v293 = vpop.f32.mrf.mxu0
        %v294 = vadd.f32 0.0, %v293
        %295 = vmatmul.bf16.gmra.mxu0 %v258
        %v296 = vpop.f32.mrf.mxu0
        %v297 = vadd.f32 0.0, %v296
        %v298 = vpop.f32.mrf.mxu0
        %v299 = vadd.f32 0.0, %v298
        %300 = vmatmul.bf16.gmra.mxu0 %v261
        %v301 = vpop.f32.mrf.mxu0
        %v302 = vadd.f32 0.0, %v301
        %v303 = vpop.f32.mrf.mxu0
        %v304 = vadd.f32 0.0, %v303
        %305 = vmatmul.bf16.gmra.mxu0 %v264
        %v306 = vpop.f32.mrf.mxu0
        %v307 = vadd.f32 0.0, %v306
        %v308 = vpop.f32.mrf.mxu0
        %v309 = vadd.f32 0.0, %v308
        %310 = vdwg.mxu0
        %311 = vmatpush.bf16.msra.mxu0 0
        %312 = vmatpush.bf16.msra.mxu0 0
        %313 = vmatpush.bf16.msra.mxu0 0
        %314 = vmatpush.bf16.msra.mxu0 0
        %315 = vmatpush.bf16.msra.mxu0 0
        %316 = vmatpush.bf16.msra.mxu0 0
        %317 = vmatpush.bf16.msra.mxu0 %v274
        %318 = vmatpush.bf16.msra.mxu0 %v242
        %319 = vmatmul.bf16.gmra.mxu0 %v255
        %v320 = vpop.f32.mrf.mxu0
        %v321 = vadd.f32 0.0, %v320
        %v322 = vpop.f32.mrf.mxu0
        %v323 = vadd.f32 0.0, %v322
        %324 = vmatmul.bf16.gmra.mxu0 %v258
        %v325 = vpop.f32.mrf.mxu0
        %v326 = vadd.f32 0.0, %v325
        %v327 = vpop.f32.mrf.mxu0
        %v328 = vadd.f32 0.0, %v327
        %329 = vmatmul.bf16.gmra.mxu0 %v261
        %v330 = vpop.f32.mrf.mxu0
        %v331 = vadd.f32 0.0, %v330
        %v332 = vpop.f32.mrf.mxu0
        %v333 = vadd.f32 0.0, %v332
        %334 = vmatmul.bf16.gmra.mxu0 %v264
        %v335 = vpop.f32.mrf.mxu0
        %v336 = vadd.f32 0.0, %v335
        %v337 = vpop.f32.mrf.mxu0
        %v338 = vadd.f32 0.0, %v337
        %339 = vdwg.mxu0
        %340 = vmatpush.bf16.msra.mxu0 0
        %341 = vmatpush.bf16.msra.mxu0 0
        %342 = vmatpush.bf16.msra.mxu0 0
        %343 = vmatpush.bf16.msra.mxu0 0
        %344 = vmatpush.bf16.msra.mxu0 0
        %345 = vmatpush.bf16.msra.mxu0 0
        %346 = vmatpush.bf16.msra.mxu0 %v277
        %347 = vmatpush.bf16.msra.mxu0 %v243
        %348 = vmatmul.bf16.gmra.mxu0 %v255
        %v349 = vpop.f32.mrf.mxu0
        %v350 = vadd.f32 0.0, %v349
        %v351 = vpop.f32.mrf.mxu0
        %v352 = vadd.f32 0.0, %v351
        %353 = vmatmul.bf16.gmra.mxu0 %v258
        %v354 = vpop.f32.mrf.mxu0
        %v355 = vadd.f32 0.0, %v354
        %v356 = vpop.f32.mrf.mxu0
        %v357 = vadd.f32 0.0, %v356
        %358 = vmatmul.bf16.gmra.mxu0 %v261
        %v359 = vpop.f32.mrf.mxu0
        %v360 = vadd.f32 0.0, %v359
        %v361 = vpop.f32.mrf.mxu0
        %v362 = vadd.f32 0.0, %v361
        %363 = vmatmul.bf16.gmra.mxu0 %v264
        %v364 = vpop.f32.mrf.mxu0
        %v365 = vadd.f32 0.0, %v364
        %v366 = vpop.f32.mrf.mxu0
        %v367 = vadd.f32 0.0, %v366
        %368 = vdwg.mxu0
        %369 = vmatpush.bf16.msra.mxu0 0
        %370 = vmatpush.bf16.msra.mxu0 0
        %371 = vmatpush.bf16.msra.mxu0 0
        %372 = vmatpush.bf16.msra.mxu0 0
        %373 = vmatpush.bf16.msra.mxu0 0
        %374 = vmatpush.bf16.msra.mxu0 0
        %375 = vmatpush.bf16.msra.mxu0 %v280
        %376 = vmatpush.bf16.msra.mxu0 %v244
        %377 = vmatmul.bf16.gmra.mxu0 %v255
        %v378 = vpop.f32.mrf.mxu0
        %v379 = vadd.f32 0.0, %v378
        %v380 = vpop.f32.mrf.mxu0
        %v381 = vadd.f32 0.0, %v380
        %382 = vmatmul.bf16.gmra.mxu0 %v258
        %v383 = vpop.f32.mrf.mxu0
        %v384 = vadd.f32 0.0, %v383
        %v385 = vpop.f32.mrf.mxu0
        %v386 = vadd.f32 0.0, %v385
        %387 = vmatmul.bf16.gmra.mxu0 %v261
        %v388 = vpop.f32.mrf.mxu0
        %v389 = vadd.f32 0.0, %v388
        %v390 = vpop.f32.mrf.mxu0
        %v391 = vadd.f32 0.0, %v390
        %392 = vmatmul.bf16.gmra.mxu0 %v264
        %v393 = vpop.f32.mrf.mxu0
        %v394 = vadd.f32 0.0, %v393
        %v395 = vpop.f32.mrf.mxu0
        %v396 = vadd.f32 0.0, %v395
        %397 = vdwg.mxu0
        %398 = vst [vmem:[%s185] sm:$0xff] %v292
        %399 = vst [vmem:[%s185 + $0x8] sm:$0xff] %v321
        %400 = vst [vmem:[%s185 + $0x10] sm:$0xff] %v350
        %401 = vst [vmem:[%s185 + $0x18] sm:$0xff] %v379
        %402 = vst [vmem:[%s185 + $0x20] sm:$0xff] %v294
        %403 = vst [vmem:[%s185 + $0x28] sm:$0xff] %v323
        %404 = vst [vmem:[%s185 + $0x30] sm:$0xff] %v352
        %405 = vst [vmem:[%s185 + $0x38] sm:$0xff] %v381
        %406 = vst [vmem:[%s185 + $0x40] sm:$0xff] %v297
        %407 = vst [vmem:[%s185 + $0x48] sm:$0xff] %v326
        %408 = vst [vmem:[%s185 + $0x50] sm:$0xff] %v355
        %409 = vst [vmem:[%s185 + $0x58] sm:$0xff] %v384
        %410 = vst [vmem:[%s185 + $0x60] sm:$0xff] %v299
        %411 = vst [vmem:[%s185 + $0x68] sm:$0xff] %v328
        %412 = vst [vmem:[%s185 + $0x70] sm:$0xff] %v357
        %413 = vst [vmem:[%s185 + $0x78] sm:$0xff] %v386
        %414 = vst [vmem:[%s185 + $0x80] sm:$0xff] %v302
        %415 = vst [vmem:[%s185 + $0x88] sm:$0xff] %v331
        %416 = vst [vmem:[%s185 + $0x90] sm:$0xff] %v360
        %417 = vst [vmem:[%s185 + $0x98] sm:$0xff] %v389
        %418 = vst [vmem:[%s185 + $0xa0] sm:$0xff] %v304
        %419 = vst [vmem:[%s185 + $0xa8] sm:$0xff] %v333
        %420 = vst [vmem:[%s185 + $0xb0] sm:$0xff] %v362
        %421 = vst [vmem:[%s185 + $0xb8] sm:$0xff] %v391
        %422 = vst [vmem:[%s185 + $0xc0] sm:$0xff] %v307
        %423 = vst [vmem:[%s185 + $0xc8] sm:$0xff] %v336
        %424 = vst [vmem:[%s185 + $0xd0] sm:$0xff] %v365
        %425 = vst [vmem:[%s185 + $0xd8] sm:$0xff] %v394
        %426 = vst [vmem:[%s185 + $0xe0] sm:$0xff] %v309
        %427 = vst [vmem:[%s185 + $0xe8] sm:$0xff] %v338
        %428 = vst [vmem:[%s185 + $0xf0] sm:$0xff] %v367
        %429 = vst [vmem:[%s185 + $0xf8] sm:$0xff] %v396
        %s430 = sand.u32 %s84, 1
        %s431 = sand.u32 %s84, 1
        %s432 = smul.addr %s431, 256
        %s433 = scalar_lea.vmem [#allocation3], %s432
        // Predicated region
        $region52: #{a_call__.1} parent=46 // pred_check
          %p434 = pneg %p94
        $region53: #{a_call__.1} parent=46 // pred_check_branch
          %436 = sbr.rel (%p434) target = $region55
        $region54: #{a_call__.1} parent=46 // pred_region
          %s437 = smul.u32 4, %s18
          %s438 = smul.addr %s17, 64
          %s439 = sadd.s32 %s437, %s438
          %s440 = smul.addr %s439, 8
          %s441 = scalar_lea.vmem %s2, %s440
          // Predicated region
          $region56: #{a_call__.1} parent=54 // pred_check
            _
          $region57: #{a_call__.1} parent=54 // pred_check_branch
            %443 = sbr.rel (0) target = $region59
          $region58: #{a_call__.1} parent=54 // pred_region
            // Predicated region
            $region60: #{a_call__.1} parent=58 // pred_check
              _
            $region61: #{a_call__.1} parent=58 // pred_check_branch
              %445 = sbr.rel (0) target = $region63
            $region62: #{a_call__.1} parent=58 // pred_region
              loop: start=0, step=1, limit=1
              $region64: #{a_call__.1} parent=62 // loop_pre_header
                _
              $region65: #{a_call__.1} parent=62 // loop_header
                %s447 = sphi 0, %s451
                %p448 = scmp.ge.s32.totalorder %s447, 1
                %s452 = sphi %s433, %s433
                %s453 = sphi %s441, %s441
              $region66: #{a_call__.1} parent=62 // loop_header_branch
                %450 = sbr.rel (%p448) target = $region70
              $region67: #{a_call__.1} parent=62 // loop_body
                %v454 = vld [vmem:[%s452] sm:$0xff]
                %455 = vst [vmem:[%s453] sm:$0xff] %v454
                %v456 = vld [vmem:[%s452 + $0x8] sm:$0xff]
                %457 = vst [vmem:[%s453 + $0x8] sm:$0xff] %v456
                %v458 = vld [vmem:[%s452 + $0x10] sm:$0xff]
                %459 = vst [vmem:[%s453 + $0x10] sm:$0xff] %v458
                %v460 = vld [vmem:[%s452 + $0x18] sm:$0xff]
                %461 = vst [vmem:[%s453 + $0x18] sm:$0xff] %v460
                %v462 = vld [vmem:[%s452 + $0x20] sm:$0xff]
                %463 = vst [vmem:[%s453 + $0x40] sm:$0xff] %v462
                %v464 = vld [vmem:[%s452 + $0x28] sm:$0xff]
                %465 = vst [vmem:[%s453 + $0x48] sm:$0xff] %v464
                %v466 = vld [vmem:[%s452 + $0x30] sm:$0xff]
                %467 = vst [vmem:[%s453 + $0x50] sm:$0xff] %v466
                %v468 = vld [vmem:[%s452 + $0x38] sm:$0xff]
                %469 = vst [vmem:[%s453 + $0x58] sm:$0xff] %v468
                %v470 = vld [vmem:[%s452 + $0x40] sm:$0xff]
                %471 = vst [vmem:[%s453 + $0x80] sm:$0xff] %v470
                %v472 = vld [vmem:[%s452 + $0x48] sm:$0xff]
                %473 = vst [vmem:[%s453 + $0x88] sm:$0xff] %v472
                %v474 = vld [vmem:[%s452 + $0x50] sm:$0xff]
                %475 = vst [vmem:[%s453 + $0x90] sm:$0xff] %v474
                %v476 = vld [vmem:[%s452 + $0x58] sm:$0xff]
                %477 = vst [vmem:[%s453 + $0x98] sm:$0xff] %v476
                %v478 = vld [vmem:[%s452 + $0x60] sm:$0xff]
                %479 = vst [vmem:[%s453 + $0xc0] sm:$0xff] %v478
                %v480 = vld [vmem:[%s452 + $0x68] sm:$0xff]
                %481 = vst [vmem:[%s453 + $0xc8] sm:$0xff] %v480
                %v482 = vld [vmem:[%s452 + $0x70] sm:$0xff]
                %483 = vst [vmem:[%s453 + $0xd0] sm:$0xff] %v482
                %v484 = vld [vmem:[%s452 + $0x78] sm:$0xff]
                %485 = vst [vmem:[%s453 + $0xd8] sm:$0xff] %v484
                %v486 = vld [vmem:[%s452 + $0x80] sm:$0xff]
                %487 = vst [vmem:[%s453 + $0x100] sm:$0xff] %v486
                %v488 = vld [vmem:[%s452 + $0x88] sm:$0xff]
                %489 = vst [vmem:[%s453 + $0x108] sm:$0xff] %v488
                %v490 = vld [vmem:[%s452 + $0x90] sm:$0xff]
                %491 = vst [vmem:[%s453 + $0x110] sm:$0xff] %v490
                %v492 = vld [vmem:[%s452 + $0x98] sm:$0xff]
                %493 = vst [vmem:[%s453 + $0x118] sm:$0xff] %v492
                %v494 = vld [vmem:[%s452 + $0xa0] sm:$0xff]
                %495 = vst [vmem:[%s453 + $0x140] sm:$0xff] %v494
                %v496 = vld [vmem:[%s452 + $0xa8] sm:$0xff]
                %497 = vst [vmem:[%s453 + $0x148] sm:$0xff] %v496
                %v498 = vld [vmem:[%s452 + $0xb0] sm:$0xff]
                %499 = vst [vmem:[%s453 + $0x150] sm:$0xff] %v498
                %v500 = vld [vmem:[%s452 + $0xb8] sm:$0xff]
                %501 = vst [vmem:[%s453 + $0x158] sm:$0xff] %v500
                %v502 = vld [vmem:[%s452 + $0xc0] sm:$0xff]
                %503 = vst [vmem:[%s453 + $0x180] sm:$0xff] %v502
                %v504 = vld [vmem:[%s452 + $0xc8] sm:$0xff]
                %505 = vst [vmem:[%s453 + $0x188] sm:$0xff] %v504
                %v506 = vld [vmem:[%s452 + $0xd0] sm:$0xff]
                %507 = vst [vmem:[%s453 + $0x190] sm:$0xff] %v506
                %v508 = vld [vmem:[%s452 + $0xd8] sm:$0xff]
                %509 = vst [vmem:[%s453 + $0x198] sm:$0xff] %v508
                %v510 = vld [vmem:[%s452 + $0xe0] sm:$0xff]
                %511 = vst [vmem:[%s453 + $0x1c0] sm:$0xff] %v510
                %v512 = vld [vmem:[%s452 + $0xe8] sm:$0xff]
                %513 = vst [vmem:[%s453 + $0x1c8] sm:$0xff] %v512
                %v514 = vld [vmem:[%s452 + $0xf0] sm:$0xff]
                %515 = vst [vmem:[%s453 + $0x1d0] sm:$0xff] %v514
                %v516 = vld [vmem:[%s452 + $0xf8] sm:$0xff]
                %517 = vst [vmem:[%s453 + $0x1d8] sm:$0xff] %v516
              $region68: #{a_call__.1} parent=62 // loop_footer
                %s451 = sadd.s32 1, %s447
              $region69: #{a_call__.1} parent=62 // loop_footer_branch
                %446 = sbr.rel target = $region65
              $region70: #{a_call__.1} parent=62 // loop_exit
                _
            $region63: #{a_call__.1} parent=58 // pred_fallthru
              _
            // Predicated region
            $region71: #{a_call__.1} parent=58 // pred_check
              _
            $region72: #{a_call__.1} parent=58 // pred_check_branch
              %519 = sbr.rel target = $region74
            $region73: #{a_call__.1} parent=58 // pred_region
              _
            $region74: #{a_call__.1} parent=58 // pred_fallthru
              _
          $region59: #{a_call__.1} parent=54 // pred_fallthru
            _
          %520 = vnop
        $region55: #{a_call__.1} parent=46 // pred_fallthru
          _
      $region47: #{a_call__.1} parent=5 // pred_fallthru
        _
      %p521 = scmp.le.s32.totalorder 2, %s8
      // Predicated region
      $region75: #{a_call__.1} parent=5 // pred_check
        %p522 = pneg %p521
      $region76: #{a_call__.1} parent=5 // pred_check_branch
        %524 = sbr.rel (%p522) target = $region78
      $region77: #{a_call__.1} parent=5 // pred_region
        %s525 = ssub.s32 %s8, 2
        // Predicated region
        $region79: #{a_call__.1} parent=77 // pred_check
          %p526 = pneg %p100
        $region80: #{a_call__.1} parent=77 // pred_check_branch
          %528 = sbr.rel (%p526) target = $region82
        $region81: #{a_call__.1} parent=77 // pred_region
          %s529 = sand.u32 %s85, 1
          %s530 = sand.u32 %s85, 1
          %s531 = smul.addr %s530, 256
          %s532 = scalar_lea.vmem [#allocation3], %s531
        $region82: #{a_call__.1} parent=77 // pred_fallthru
          _
      $region78: #{a_call__.1} parent=5 // pred_fallthru
        _
    $region6: #{a_call__.1} parent=1 // loop_footer
      %s12 = sadd.s32 1, %s8
    $region7: #{a_call__.1} parent=1 // loop_footer_branch
      %7 = sbr.rel target = $region3
    $region8: #{a_call__.1} parent=1 // loop_exit
      _

</llo_original>
